<compile_context>
chip_gen: v7x
topology: tpu7x:2x2x1
jax: 0.10.0
libtpu: 0.0.40
codegen_flags: <defaults>
</compile_context>

<pallas_src>
import functools

import jax
import jax.numpy as jnp
from jax.experimental import pallas as pl
from jax.experimental.pallas import tpu as pltpu

HIDDEN = 1024     # fixed by the module definition (nn.Linear(input_dim, 1024))
HEAD_PAD = 128    # fused head width: num_classes + 2, zero-padded to a full lane reg


def _round_up(x, m):
    return (x + m - 1) // m * m


def _emotion_kernel(x_ref, w1_ref, b1_ref, wh_ref, bh_ref, feat_ref, head_ref):
    """One batch tile: linear1 + ReLU, then a single fused lane-dense head matmul."""
    # bf16 operands on the MXU, f32 accumulation; elementwise (bias, ReLU) in f32.
    x = x_ref[...].astype(jnp.bfloat16)
    feats = jnp.dot(x, w1_ref[...], preferred_element_type=jnp.float32)
    feats = jnp.maximum(feats + b1_ref[...], 0.0)

    # Single bf16 cast reused for both the (bf16) store and the head matmul operand.
    feat_bf = feats.astype(jnp.bfloat16)
    feat_ref[...] = feat_bf  # Dropout(p=0.1) is identity in eval mode.

    # Fused classification + domain head -> one (TM, 128) unmasked bf16 store.
    head = jnp.dot(feat_bf, wh_ref[...], preferred_element_type=jnp.float32)
    head_ref[...] = (head + bh_ref[...]).astype(head_ref.dtype)


def emotion_forward(x, params, num_classes, training=False):
    """Pallas implementation of EmotionModel.forward.

    Returns (features, logits, domain_pred, target_logits), matching the
    PyTorch module's return tuple (features/head stored in bf16).
    """
    B, D = x.shape
    half = B // 2

    # Batch tile: up to 512 rows (v5e-safe with bf16 outputs), but never more than
    # half the (rounded-up) batch so large batches get >= 2 parallel grid steps
    # (megacore sharding on v7x; harmless on v5e/v6e).
    TM = max(8, min(512, _round_up(pl.cdiv(B, 2), 8)))
    grid = (pl.cdiv(B, TM),)  # ragged last block is masked by Pallas; no padding.

    row = lambda i: (i, 0)   # batch-tiled arrays
    rep = lambda i: (0, 0)   # weights / biases: resident across grid steps

    feats, head = pl.pallas_call(
        _emotion_kernel,
        grid=grid,
        in_specs=[
            pl.BlockSpec((TM, D), row),
            pl.BlockSpec((D, HIDDEN), rep),
            pl.BlockSpec((1, HIDDEN), rep),
            pl.BlockSpec((HIDDEN, HEAD_PAD), rep),
            pl.BlockSpec((1, HEAD_PAD), rep),
        ],
        out_specs=(
            pl.BlockSpec((TM, HIDDEN), row),
            pl.BlockSpec((TM, HEAD_PAD), row),
        ),
        out_shape=(
            jax.ShapeDtypeStruct((B, HIDDEN), jnp.bfloat16),
            jax.ShapeDtypeStruct((B, HEAD_PAD), jnp.bfloat16),
        ),
        compiler_params=pltpu.CompilerParams(
            dimension_semantics=("parallel",)),
    )(x, params["w1"], params["b1"], params["w_head"], params["b_head"])

    # Tiny slices / casts only (no full-feature-array copy).
    logits_full = head[:, :num_classes].astype(jnp.float32)
    domain_pred = head[:, num_classes:num_classes + 2].astype(jnp.float32)
    target_logits = logits_full[half:]
    logits = logits_full[:half] if training else target_logits
    return feats, logits, domain_pred, target_logits


def init_params(key, input_dim, num_classes):
    """Parameter init mirroring the module's __init__ shapes, with the two heads
    fused into one zero-padded (HIDDEN, 128) weight / (1, 128) bias.

    (linear1: trunc_normal weight / 0.1 bias; linear2 & linear3 weights are
    overwritten to constant 0.1 in the original __init__.)
    """
    assert num_classes + 2 <= HEAD_PAD
    k1, k2, k3 = jax.random.split(key, 3)
    bound = 1.0 / jnp.sqrt(HIDDEN)

    w1 = 0.1 * jax.random.truncated_normal(k1, -2.0, 2.0, (input_dim, HIDDEN),
                                           dtype=jnp.float32)
    b1 = jnp.full((1, HIDDEN), 0.1, dtype=jnp.float32)

    w2 = jnp.full((HIDDEN, num_classes), 0.1, dtype=jnp.float32)
    b2 = jax.random.uniform(k2, (1, num_classes), dtype=jnp.float32,
                            minval=-bound, maxval=bound)
    w3 = jnp.full((HIDDEN, 2), 0.1, dtype=jnp.float32)
    b3 = jax.random.uniform(k3, (1, 2), dtype=jnp.float32,
                            minval=-bound, maxval=bound)

    w_head = jnp.zeros((HIDDEN, HEAD_PAD), jnp.float32)
    w_head = w_head.at[:, :num_classes].set(w2)
    w_head = w_head.at[:, num_classes:num_classes + 2].set(w3)
    b_head = jnp.zeros((1, HEAD_PAD), jnp.float32)
    b_head = b_head.at[:, :num_classes].set(b2)
    b_head = b_head.at[:, num_classes:num_classes + 2].set(b3)

    return dict(
        w1=w1.astype(jnp.bfloat16), b1=b1,
        w_head=w_head.astype(jnp.bfloat16), b_head=b_head,
    )


def _reference_forward(x, params, num_classes, training=False):
    """Plain-JAX reference with identical bf16-operand / f32-accumulate math."""
    feats = jnp.dot(x.astype(jnp.bfloat16), params["w1"],
                    preferred_element_type=jnp.float32)
    feats = jnp.maximum(feats + params["b1"], 0.0)
    feat_bf = feats.astype(jnp.bfloat16)
    head = (jnp.dot(feat_bf, params["w_head"],
                    preferred_element_type=jnp.float32)
            + params["b_head"]).astype(jnp.bfloat16)
    half = x.shape[0] // 2
    logits_full = head[:, :num_classes].astype(jnp.float32)
    domain_pred = head[:, num_classes:num_classes + 2].astype(jnp.float32)
    target_logits = logits_full[half:]
    logits = logits_full[:half] if training else target_logits
    return feat_bf, logits, domain_pred, target_logits


if __name__ == "__main__":
    B, INPUT_DIM, NUM_CLASSES = 8, 32, 4  # B must be even (source/target halves)

    key = jax.random.PRNGKey(0)
    kx, kp = jax.random.split(key)
    x = jax.random.normal(kx, (B, INPUT_DIM), dtype=jnp.float32)
    params = init_params(kp, INPUT_DIM, NUM_CLASSES)

    fwd = jax.jit(functools.partial(emotion_forward,
                                    num_classes=NUM_CLASSES, training=False))
    feats, logits, domain_pred, target_logits = fwd(x, params)
    jax.block_until_ready((feats, logits, domain_pred, target_logits))

    # correctness check vs. plain-JAX reference (same bf16/f32 math)
    rf, rl, rd, rt = _reference_forward(x, params, NUM_CLASSES, training=False)
    assert feats.shape == (B, HIDDEN) and feats.dtype == jnp.bfloat16
    assert logits.shape == (B // 2, NUM_CLASSES)
    assert domain_pred.shape == (B, 2)
    assert target_logits.shape == (B // 2, NUM_CLASSES)
    assert jnp.allclose(feats.astype(jnp.float32), rf.astype(jnp.float32),
                        atol=1e-2, rtol=1e-2)
    assert jnp.allclose(logits, rl, atol=5e-2, rtol=5e-2)
    assert jnp.allclose(domain_pred, rd, atol=5e-2, rtol=5e-2)
    assert jnp.allclose(target_logits, rt, atol=5e-2, rtol=5e-2)

    print("KERNEL_OK")
</pallas_src>

<mosaic_0001>
module attributes {stable_mosaic.version = 11 : i64} {
  func.func @_emotion_kernel(%arg0: i32, %arg1: memref<8x32xf32, #tpu.memory_space<vmem>>, %arg2: memref<32x1024xbf16, #tpu.memory_space<vmem>>, %arg3: memref<1x1024xf32, #tpu.memory_space<vmem>>, %arg4: memref<1024x128xbf16, #tpu.memory_space<vmem>>, %arg5: memref<1x128xf32, #tpu.memory_space<vmem>>, %arg6: memref<8x1024xbf16, #tpu.memory_space<vmem>>, %arg7: memref<8x128xbf16, #tpu.memory_space<vmem>>) attributes {dimension_semantics = [#tpu.dimension_semantics<parallel>], iteration_bounds = array<i64: 1>, scalar_prefetch = 0 : i64, scratch_operands = 0 : i64, tpu.core_type = #tpu.core_type<tc>, window_params = [{transform_indices = @transform_0, window_bounds = array<i64: 8, 32>}, {pipeline_mode = #tpu.pipeline_mode<synchronous>, transform_indices = @transform_1, window_bounds = array<i64: 32, 1024>}, {pipeline_mode = #tpu.pipeline_mode<synchronous>, transform_indices = @transform_2, window_bounds = array<i64: 1, 1024>}, {pipeline_mode = #tpu.pipeline_mode<synchronous>, transform_indices = @transform_3, window_bounds = array<i64: 1024, 128>}, {pipeline_mode = #tpu.pipeline_mode<synchronous>, transform_indices = @transform_4, window_bounds = array<i64: 1, 128>}, {transform_indices = @transform_5, window_bounds = array<i64: 8, 1024>}, {transform_indices = @transform_6, window_bounds = array<i64: 8, 128>}]} {
    %c0 = arith.constant 0 : index
    %c0_0 = arith.constant 0 : index
    %0 = vector.load %arg1[%c0, %c0_0] : memref<8x32xf32, #tpu.memory_space<vmem>>, vector<8x32xf32>
    %1 = arith.truncf %0 : vector<8x32xf32> to vector<8x32xbf16>
    %c0_1 = arith.constant 0 : index
    %c0_2 = arith.constant 0 : index
    %2 = vector.load %arg2[%c0_1, %c0_2] : memref<32x1024xbf16, #tpu.memory_space<vmem>>, vector<32x1024xbf16>
    %cst = arith.constant dense<0.000000e+00> : vector<8x1024xf32>
    %3 = tpu.matmul %1, %2, %cst {dimension_numbers = #tpu.dot_dimension_numbers<[1], [0], [0], [1], [0, 0, 1, 1], [], []>} : vector<8x32xbf16>, vector<32x1024xbf16>, vector<8x1024xf32> -> vector<8x1024xf32>
    %c0_3 = arith.constant 0 : index
    %c0_4 = arith.constant 0 : index
    %4 = vector.load %arg3[%c0_3, %c0_4] : memref<1x1024xf32, #tpu.memory_space<vmem>>, vector<1x1024xf32>
    %5 = vector.broadcast %4 : vector<1x1024xf32> to vector<8x1024xf32>
    %6 = arith.addf %3, %5 : vector<8x1024xf32>
    %cst_5 = arith.constant 0.000000e+00 : f32
    %7 = vector.broadcast %cst_5 : f32 to vector<8x1024xf32>
    %8 = arith.maximumf %6, %7 : vector<8x1024xf32>
    %9 = arith.truncf %8 : vector<8x1024xf32> to vector<8x1024xbf16>
    %c0_6 = arith.constant 0 : index
    %c0_7 = arith.constant 0 : index
    %10 = vector.load %arg6[%c0_6, %c0_7] : memref<8x1024xbf16, #tpu.memory_space<vmem>>, vector<8x1024xbf16>
    tpu.vector_store %arg6[%c0_6, %c0_7], %9 {strides = array<i32>} : memref<8x1024xbf16, #tpu.memory_space<vmem>>, vector<8x1024xbf16>,
    %c0_8 = arith.constant 0 : index
    %c0_9 = arith.constant 0 : index
    %11 = vector.load %arg4[%c0_8, %c0_9] : memref<1024x128xbf16, #tpu.memory_space<vmem>>, vector<1024x128xbf16>
    %cst_10 = arith.constant dense<0.000000e+00> : vector<8x128xf32>
    %12 = tpu.matmul %9, %11, %cst_10 {dimension_numbers = #tpu.dot_dimension_numbers<[1], [0], [0], [1], [0, 0, 1, 1], [], []>} : vector<8x1024xbf16>, vector<1024x128xbf16>, vector<8x128xf32> -> vector<8x128xf32>
    %c0_11 = arith.constant 0 : index
    %c0_12 = arith.constant 0 : index
    %13 = vector.load %arg5[%c0_11, %c0_12] : memref<1x128xf32, #tpu.memory_space<vmem>>, vector<1x128xf32>
    %14 = vector.broadcast %13 : vector<1x128xf32> to vector<8x128xf32>
    %15 = arith.addf %12, %14 : vector<8x128xf32>
    %16 = arith.truncf %15 : vector<8x128xf32> to vector<8x128xbf16>
    %c0_13 = arith.constant 0 : index
    %c0_14 = arith.constant 0 : index
    %17 = vector.load %arg7[%c0_13, %c0_14] : memref<8x128xbf16, #tpu.memory_space<vmem>>, vector<8x128xbf16>
    tpu.vector_store %arg7[%c0_13, %c0_14], %16 {strides = array<i32>} : memref<8x128xbf16, #tpu.memory_space<vmem>>, vector<8x128xbf16>,
    return
  }
  func.func @transform_0(%arg0: i32) -> (i32, i32) {
    %c0_i32 = arith.constant 0 : i32
    %c0_i32_0 = arith.constant 0 : i32
    return %arg0, %c0_i32 : i32, i32
  }
  func.func @transform_1(%arg0: i32) -> (i32, i32) {
    %c0_i32 = arith.constant 0 : i32
    %c0_i32_0 = arith.constant 0 : i32
    %c0_i32_1 = arith.constant 0 : i32
    return %c0_i32, %c0_i32_0 : i32, i32
  }
  func.func @transform_2(%arg0: i32) -> (i32, i32) {
    %c0_i32 = arith.constant 0 : i32
    %c0_i32_0 = arith.constant 0 : i32
    %c0_i32_1 = arith.constant 0 : i32
    return %c0_i32, %c0_i32_0 : i32, i32
  }
  func.func @transform_3(%arg0: i32) -> (i32, i32) {
    %c0_i32 = arith.constant 0 : i32
    %c0_i32_0 = arith.constant 0 : i32
    %c0_i32_1 = arith.constant 0 : i32
    return %c0_i32, %c0_i32_0 : i32, i32
  }
  func.func @transform_4(%arg0: i32) -> (i32, i32) {
    %c0_i32 = arith.constant 0 : i32
    %c0_i32_0 = arith.constant 0 : i32
    %c0_i32_1 = arith.constant 0 : i32
    return %c0_i32, %c0_i32_0 : i32, i32
  }
  func.func @transform_5(%arg0: i32) -> (i32, i32) {
    %c0_i32 = arith.constant 0 : i32
    %c0_i32_0 = arith.constant 0 : i32
    return %arg0, %c0_i32 : i32, i32
  }
  func.func @transform_6(%arg0: i32) -> (i32, i32) {
    %c0_i32 = arith.constant 0 : i32
    %c0_i32_0 = arith.constant 0 : i32
    return %arg0, %c0_i32 : i32, i32
  }
}

</mosaic_0001>

<llo_original>
// kernel: emotion_forward.1
$region0: #{emotion_forward.1}
  #allocation0 [shape = 'u32[]', space=smem, size = 0x4, offset = 0x4, fixed_abs, tag = 'smem constant byte address 0x4 - core index']
  #allocation1 [shape = 'u32[144,128]{1,0:T(1,128)}', space=vmem, size = 0x12000, scoped, tag = 'internal scratch']
  %s0 = inlined_call_operand.hbm [shape: f32[8,32], index: 0, kind: input, shape index: {}]
  %s1 = inlined_call_operand.hbm [shape: bf16[32,1024], index: 1, kind: input, shape index: {}]
  %s2 = inlined_call_operand.hbm [shape: f32[1,1024], index: 2, kind: input, shape index: {}]
  %s3 = inlined_call_operand.hbm [shape: bf16[1024,128], index: 3, kind: input, shape index: {}]
  %s4 = inlined_call_operand.vmem [shape: f32[1,128], index: 4, kind: input, shape index: {}]
  %s5 = inlined_call_operand.hbm [shape: bf16[8,1024], index: 5, kind: output, shape index: {0}]
  %s6 = inlined_call_operand.vmem [shape: bf16[8,128], index: 6, kind: output, shape index: {1}]
  %7 = xla_tuple %s5, %s6
  %s8 = sld [smem:[#allocation0]]
  $region54: #{emotion_forward.1} parent=0
    _
  %s10 = ssub.s32 1, %s8
  %s11 = scalar_select 0, %s10, %s8
  $region1: #{emotion_forward.1} parent=0
    #allocation2 [shape = 'u8[4096]{0}', space=vmem, size = 0x1000, scoped, tag = 'input window, operand 0, single buffered']
    #allocation3 [shape = 's32[1]{0}', space=sflag, size = 0x4, scoped, tag = 'scoped memory for emotion_forward.1']
    #allocation4 [shape = 's32[1]{0}', space=sflag, size = 0x4, scoped, tag = 'scoped memory for emotion_forward.1']
    #allocation5 [shape = 'u8[65536]{0}', space=vmem, size = 0x10000, scoped, tag = 'input window, operand 1, single buffered']
    #allocation6 [shape = 's32[1]{0}', space=sflag, size = 0x4, scoped, tag = 'scoped memory for emotion_forward.1']
    #allocation7 [shape = 'u8[4096]{0}', space=vmem, size = 0x1000, scoped, tag = 'input window, operand 2, single buffered']
    #allocation8 [shape = 'u8[262144]{0}', space=vmem, size = 0x40000, scoped, tag = 'input window, operand 3, single buffered']
    #allocation9 [shape = 's32[1]{0}', space=sflag, size = 0x4, scoped, tag = 'scoped memory for emotion_forward.1']
    #allocation10 [shape = 'u8[16384]{0}', space=vmem, size = 0x4000, scoped, tag = 'output window, operand 0, single buffered']
    %12 = vsyncpa [#allocation3], 0
    %13 = vsyncpa [#allocation6], 0
    %14 = vsyncpa [#allocation9], 0
    %15 = vsyncpa [#allocation4], 0
    // Predicated region
    $region2: #{emotion_forward.1} parent=1 // pred_check
      _
    $region3: #{emotion_forward.1} parent=1 // pred_check_branch
      %17 = sbr.rel (0) target = $region5
    $region4: #{emotion_forward.1} parent=1 // pred_region
      %s19 = ssub.s32 128, 128
      %20 = vsyncadd [#allocation3], %s19
      %s22 = sshll.u32 [#allocation2], 4
      %s23 = int_to_ptr.vmem [resolvable:$true] %s22
      %25 = dma.hbm_to_vmem [thread:$0]  %s0, 128, %s23, [#allocation3]
    $region5: #{emotion_forward.1} parent=1 // pred_fallthru
      _
    // Predicated region
    $region6: #{emotion_forward.1} parent=1 // pred_check
      _
    $region7: #{emotion_forward.1} parent=1 // pred_check_branch
      %27 = sbr.rel (0) target = $region9
    $region8: #{emotion_forward.1} parent=1 // pred_region
      %s29 = ssub.s32 2048, 2048
      %30 = vsyncadd [#allocation6], %s29
      %s31 = sshll.u32 [#allocation5], 4
      %s32 = int_to_ptr.vmem [resolvable:$true] %s31
      %37 = dma.hbm_to_vmem [thread:$0]  %s1, 2048, %s32, [#allocation6], 512, 512, 32
    $region9: #{emotion_forward.1} parent=1 // pred_fallthru
      _
    // Predicated region
    $region10: #{emotion_forward.1} parent=1 // pred_check
      _
    $region11: #{emotion_forward.1} parent=1 // pred_check_branch
      %39 = sbr.rel (0) target = $region13
    $region12: #{emotion_forward.1} parent=1 // pred_region
      %s41 = ssub.s32 128, 128
      %42 = vsyncadd [#allocation6], %s41
      %s44 = sshll.u32 [#allocation7], 4
      %s45 = int_to_ptr.vmem [resolvable:$true] %s44
      %47 = dma.hbm_to_vmem [thread:$0]  %s2, 128, %s45, [#allocation6]
    $region13: #{emotion_forward.1} parent=1 // pred_fallthru
      _
    // Predicated region
    $region14: #{emotion_forward.1} parent=1 // pred_check
      _
    $region15: #{emotion_forward.1} parent=1 // pred_check_branch
      %49 = sbr.rel (0) target = $region17
    $region16: #{emotion_forward.1} parent=1 // pred_region
      %s51 = ssub.s32 8192, 8192
      %52 = vsyncadd [#allocation9], %s51
      %s53 = sshll.u32 [#allocation8], 4
      %s54 = int_to_ptr.vmem [resolvable:$true] %s53
      %59 = dma.hbm_to_vmem [thread:$0]  %s3, 8192, %s54, [#allocation9], 64, 64, 4
    $region17: #{emotion_forward.1} parent=1 // pred_fallthru
      _
    // Predicated region
    $region18: #{emotion_forward.1} parent=1 // pred_check
      _
    $region19: #{emotion_forward.1} parent=1 // pred_check_branch
      %61 = sbr.rel (0) target = $region21
    $region20: #{emotion_forward.1} parent=1 // pred_region
      _
    $region21: #{emotion_forward.1} parent=1 // pred_fallthru
      _
    // Predicated region
    $region22: #{emotion_forward.1} parent=1 // pred_check
      _
    $region23: #{emotion_forward.1} parent=1 // pred_check_branch
      %63 = sbr.rel (0) target = $region25
    $region24: #{emotion_forward.1} parent=1 // pred_region
      %64 = dma.done [#allocation3], 128
    $region25: #{emotion_forward.1} parent=1 // pred_fallthru
      _
    // Predicated region
    $region26: #{emotion_forward.1} parent=1 // pred_check
      _
    $region27: #{emotion_forward.1} parent=1 // pred_check_branch
      %66 = sbr.rel (0) target = $region29
    $region28: #{emotion_forward.1} parent=1 // pred_region
      %67 = dma.done [#allocation6], 2048
    $region29: #{emotion_forward.1} parent=1 // pred_fallthru
      _
    // Predicated region
    $region30: #{emotion_forward.1} parent=1 // pred_check
      _
    $region31: #{emotion_forward.1} parent=1 // pred_check_branch
      %69 = sbr.rel (0) target = $region33
    $region32: #{emotion_forward.1} parent=1 // pred_region
      %70 = dma.done [#allocation6], 128
    $region33: #{emotion_forward.1} parent=1 // pred_fallthru
      _
    // Predicated region
    $region34: #{emotion_forward.1} parent=1 // pred_check
      _
    $region35: #{emotion_forward.1} parent=1 // pred_check_branch
      %72 = sbr.rel (0) target = $region37
    $region36: #{emotion_forward.1} parent=1 // pred_region
      %73 = dma.done [#allocation9], 8192
    $region37: #{emotion_forward.1} parent=1 // pred_fallthru
      _
    %v75 = vld [vmem:[#allocation2] sm:$0xff]
    %v76 = vpack.c.bf16 %v75, %v75
    %v77 = vld [vmem:[#allocation5] sm:$0xff]
    %v78 = vld [vmem:[#allocation5 + $0x8] sm:$0xff]
    %v79 = vld [vmem:[#allocation5 + $0x10] sm:$0xff]
    %v80 = vld [vmem:[#allocation5 + $0x18] sm:$0xff]
    %v81 = vld [vmem:[#allocation5 + $0x20] sm:$0xff]
    %v82 = vld [vmem:[#allocation5 + $0x28] sm:$0xff]
    %v83 = vld [vmem:[#allocation5 + $0x30] sm:$0xff]
    %v84 = vld [vmem:[#allocation5 + $0x38] sm:$0xff]
    %v85 = vld [vmem:[#allocation5 + $0x40] sm:$0xff]
    %v86 = vld [vmem:[#allocation5 + $0x48] sm:$0xff]
    %v87 = vld [vmem:[#allocation5 + $0x50] sm:$0xff]
    %v88 = vld [vmem:[#allocation5 + $0x58] sm:$0xff]
    %v89 = vld [vmem:[#allocation5 + $0x60] sm:$0xff]
    %v90 = vld [vmem:[#allocation5 + $0x68] sm:$0xff]
    %v91 = vld [vmem:[#allocation5 + $0x70] sm:$0xff]
    %v92 = vld [vmem:[#allocation5 + $0x78] sm:$0xff]
    %v93 = vld [vmem:[#allocation7] sm:$0xff]
    %v95 = vlaneseq
    %v96 = vshrl.u32 %v95, 7
    %v97 = vsub.s32 0, %v96
    %v98 = vrot.slane %v93, %v97
    %v99 = vlaneseq
    %v100 = vshrl.u32 %v99, 7
    %v101 = vsub.s32 1, %v100
    %v102 = vrot.slane %v93, %v101
    %v103 = vlaneseq
    %v104 = vshrl.u32 %v103, 7
    %v105 = vsub.s32 2, %v104
    %v106 = vrot.slane %v93, %v105
    %v107 = vlaneseq
    %v108 = vshrl.u32 %v107, 7
    %v109 = vsub.s32 3, %v108
    %v110 = vrot.slane %v93, %v109
    %v111 = vlaneseq
    %v112 = vshrl.u32 %v111, 7
    %v113 = vsub.s32 4, %v112
    %v114 = vrot.slane %v93, %v113
    %v115 = vlaneseq
    %v116 = vshrl.u32 %v115, 7
    %v117 = vsub.s32 5, %v116
    %v118 = vrot.slane %v93, %v117
    %v119 = vlaneseq
    %v120 = vshrl.u32 %v119, 7
    %v121 = vsub.s32 6, %v120
    %v122 = vrot.slane %v93, %v121
    %v123 = vlaneseq
    %v124 = vshrl.u32 %v123, 7
    %v125 = vsub.s32 7, %v124
    %v126 = vrot.slane %v93, %v125
    %v151 = vunpack.c.l.b16 %v77
    %v152 = vunpack.c.h.b16 %v77
    %v153 = vunpack.c.l.b16 %v78
    %v154 = vunpack.c.h.b16 %v78
    %v155 = vunpack.c.l.b16 %v79
    %v156 = vunpack.c.h.b16 %v79
    %v157 = vunpack.c.l.b16 %v80
    %v158 = vunpack.c.h.b16 %v80
    %v159 = vunpack.c.l.b16 %v81
    %v160 = vunpack.c.h.b16 %v81
    %v161 = vunpack.c.l.b16 %v82
    %v162 = vunpack.c.h.b16 %v82
    %v163 = vunpack.c.l.b16 %v83
    %v164 = vunpack.c.h.b16 %v83
    %v165 = vunpack.c.l.b16 %v84
    %v166 = vunpack.c.h.b16 %v84
    %v167 = vunpack.c.l.b16 %v85
    %v168 = vunpack.c.h.b16 %v85
    %v169 = vunpack.c.l.b16 %v86
    %v170 = vunpack.c.h.b16 %v86
    %v171 = vunpack.c.l.b16 %v87
    %v172 = vunpack.c.h.b16 %v87
    %v173 = vunpack.c.l.b16 %v88
    %v174 = vunpack.c.h.b16 %v88
    %v175 = vunpack.c.l.b16 %v89
    %v176 = vunpack.c.h.b16 %v89
    %v177 = vunpack.c.l.b16 %v90
    %v178 = vunpack.c.h.b16 %v90
    %v179 = vunpack.c.l.b16 %v91
    %v180 = vunpack.c.h.b16 %v91
    %v181 = vunpack.c.l.b16 %v92
    %v182 = vunpack.c.h.b16 %v92
    %v183 = vpack.c.b16 %v159, %v151
    %v184 = vpack.c.b16 %v160, %v152
    %v185 = vpack.c.b16 %v161, %v153
    %v186 = vpack.c.b16 %v162, %v154
    %v187 = vpack.c.b16 %v163, %v155
    %v188 = vpack.c.b16 %v164, %v156
    %v189 = vpack.c.b16 %v165, %v157
    %v190 = vpack.c.b16 %v166, %v158
    %v191 = vpack.c.b16 %v175, %v167
    %v192 = vpack.c.b16 %v176, %v168
    %v193 = vpack.c.b16 %v177, %v169
    %v194 = vpack.c.b16 %v178, %v170
    %v195 = vpack.c.b16 %v179, %v171
    %v196 = vpack.c.b16 %v180, %v172
    %v197 = vpack.c.b16 %v181, %v173
    %v198 = vpack.c.b16 %v182, %v174
    %vm215 = vcmask 261120
    %v217 = vsel %vm215, %v76, 0
    %219 = vmatprep.subr.bf16.mxu0 %v184
    %220 = vmatpush1.bf16.msra.mxu0 %v183
    %221 = vmatprep.subr.bf16.mxu0 %v192
    %222 = vmatpush1.bf16.msra.mxu0 %v191
    %223 = vmatprep.subr.bf16.mxu0 0
    %224 = vmatpush1.bf16.msra.mxu0 0
    %225 = vmatprep.subr.bf16.mxu0 0
    %226 = vmatpush1.bf16.msra.mxu0 0
    %227 = vmatprep.subr.bf16.mxu0 0
    %228 = vmatpush1.bf16.msra.mxu0 0
    %229 = vmatprep.subr.bf16.mxu0 0
    %230 = vmatpush1.bf16.msra.mxu0 0
    %231 = vmatprep.subr.bf16.mxu0 0
    %232 = vmatpush1.bf16.msra.mxu0 0
    %233 = vmatprep.subr.bf16.mxu0 0
    %234 = vmatpush1.bf16.msra.mxu0 0
    %235 = vmatprep.subr.bf16.mxu0 0
    %236 = vmatpush1.bf16.msra.mxu0 0
    %237 = vmatprep.subr.bf16.mxu0 0
    %238 = vmatpush1.bf16.msra.mxu0 0
    %239 = vmatprep.subr.bf16.mxu0 0
    %240 = vmatpush1.bf16.msra.mxu0 0
    %241 = vmatprep.subr.bf16.mxu0 0
    %242 = vmatpush1.bf16.msra.mxu0 0
    %243 = vmatprep.subr.bf16.mxu0 0
    %244 = vmatpush1.bf16.msra.mxu0 0
    %245 = vmatprep.subr.bf16.mxu0 0
    %246 = vmatpush1.bf16.msra.mxu0 0
    %247 = vmatprep.subr.bf16.mxu0 0
    %248 = vmatpush1.bf16.msra.mxu0 0
    %249 = vmatprep.subr.bf16.mxu0 0
    %250 = vmatpush1.bf16.msra.mxu0 0
    %251 = vmatprep.mubr.bf16.mxu0 0
    %252 = vmatmul.mubr.bf16.gmra.mrb[0].mxu0 %v217
    %v253 = vpop.f32.mrb[0].mxu0
    %v254 = vadd.f32 %v98, %v253
    %v255 = vpop.f32.mrb[0].mxu0
    %v256 = vadd.f32 %v102, %v255
    %v257 = vpop.f32.mrb[0].mxu0
    %v258 = vpop.f32.mrb[0].mxu0
    %259 = vdwg.mxu0
    %260 = vmatprep.subr.bf16.mxu0 %v186
    %261 = vmatpush1.bf16.msra.mxu0 %v185
    %262 = vmatprep.subr.bf16.mxu0 %v194
    %263 = vmatpush1.bf16.msra.mxu0 %v193
    %264 = vmatprep.subr.bf16.mxu0 0
    %265 = vmatpush1.bf16.msra.mxu0 0
    %266 = vmatprep.subr.bf16.mxu0 0
    %267 = vmatpush1.bf16.msra.mxu0 0
    %268 = vmatprep.subr.bf16.mxu0 0
    %269 = vmatpush1.bf16.msra.mxu0 0
    %270 = vmatprep.subr.bf16.mxu0 0
    %271 = vmatpush1.bf16.msra.mxu0 0
    %272 = vmatprep.subr.bf16.mxu0 0
    %273 = vmatpush1.bf16.msra.mxu0 0
    %274 = vmatprep.subr.bf16.mxu0 0
    %275 = vmatpush1.bf16.msra.mxu0 0
    %276 = vmatprep.subr.bf16.mxu0 0
    %277 = vmatpush1.bf16.msra.mxu0 0
    %278 = vmatprep.subr.bf16.mxu0 0
    %279 = vmatpush1.bf16.msra.mxu0 0
    %280 = vmatprep.subr.bf16.mxu0 0
    %281 = vmatpush1.bf16.msra.mxu0 0
    %282 = vmatprep.subr.bf16.mxu0 0
    %283 = vmatpush1.bf16.msra.mxu0 0
    %284 = vmatprep.subr.bf16.mxu0 0
    %285 = vmatpush1.bf16.msra.mxu0 0
    %286 = vmatprep.subr.bf16.mxu0 0
    %287 = vmatpush1.bf16.msra.mxu0 0
    %288 = vmatprep.subr.bf16.mxu0 0
    %289 = vmatpush1.bf16.msra.mxu0 0
    %290 = vmatprep.subr.bf16.mxu0 0
    %291 = vmatpush1.bf16.msra.mxu0 0
    %292 = vmatprep.mubr.bf16.mxu0 0
    %293 = vmatmul.mubr.bf16.gmra.mrb[0].mxu0 %v217
    %v294 = vpop.f32.mrb[0].mxu0
    %v295 = vadd.f32 %v106, %v294
    %v296 = vpop.f32.mrb[0].mxu0
    %v297 = vadd.f32 %v110, %v296
    %v298 = vpop.f32.mrb[0].mxu0
    %v299 = vpop.f32.mrb[0].mxu0
    %300 = vdwg.mxu0
    %301 = vmatprep.subr.bf16.mxu0 %v188
    %302 = vmatpush1.bf16.msra.mxu0 %v187
    %303 = vmatprep.subr.bf16.mxu0 %v196
    %304 = vmatpush1.bf16.msra.mxu0 %v195
    %305 = vmatprep.subr.bf16.mxu0 0
    %306 = vmatpush1.bf16.msra.mxu0 0
    %307 = vmatprep.subr.bf16.mxu0 0
    %308 = vmatpush1.bf16.msra.mxu0 0
    %309 = vmatprep.subr.bf16.mxu0 0
    %310 = vmatpush1.bf16.msra.mxu0 0
    %311 = vmatprep.subr.bf16.mxu0 0
    %312 = vmatpush1.bf16.msra.mxu0 0
    %313 = vmatprep.subr.bf16.mxu0 0
    %314 = vmatpush1.bf16.msra.mxu0 0
    %315 = vmatprep.subr.bf16.mxu0 0
    %316 = vmatpush1.bf16.msra.mxu0 0
    %317 = vmatprep.subr.bf16.mxu0 0
    %318 = vmatpush1.bf16.msra.mxu0 0
    %319 = vmatprep.subr.bf16.mxu0 0
    %320 = vmatpush1.bf16.msra.mxu0 0
    %321 = vmatprep.subr.bf16.mxu0 0
    %322 = vmatpush1.bf16.msra.mxu0 0
    %323 = vmatprep.subr.bf16.mxu0 0
    %324 = vmatpush1.bf16.msra.mxu0 0
    %325 = vmatprep.subr.bf16.mxu0 0
    %326 = vmatpush1.bf16.msra.mxu0 0
    %327 = vmatprep.subr.bf16.mxu0 0
    %328 = vmatpush1.bf16.msra.mxu0 0
    %329 = vmatprep.subr.bf16.mxu0 0
    %330 = vmatpush1.bf16.msra.mxu0 0
    %331 = vmatprep.subr.bf16.mxu0 0
    %332 = vmatpush1.bf16.msra.mxu0 0
    %333 = vmatprep.mubr.bf16.mxu0 0
    %334 = vmatmul.mubr.bf16.gmra.mrb[0].mxu0 %v217
    %v335 = vpop.f32.mrb[0].mxu0
    %v336 = vadd.f32 %v114, %v335
    %v337 = vpop.f32.mrb[0].mxu0
    %v338 = vadd.f32 %v118, %v337
    %v339 = vpop.f32.mrb[0].mxu0
    %v340 = vpop.f32.mrb[0].mxu0
    %341 = vdwg.mxu0
    %342 = vmatprep.subr.bf16.mxu0 %v190
    %343 = vmatpush1.bf16.msra.mxu0 %v189
    %344 = vmatprep.subr.bf16.mxu0 %v198
    %345 = vmatpush1.bf16.msra.mxu0 %v197
    %346 = vmatprep.subr.bf16.mxu0 0
    %347 = vmatpush1.bf16.msra.mxu0 0
    %348 = vmatprep.subr.bf16.mxu0 0
    %349 = vmatpush1.bf16.msra.mxu0 0
    %350 = vmatprep.subr.bf16.mxu0 0
    %351 = vmatpush1.bf16.msra.mxu0 0
    %352 = vmatprep.subr.bf16.mxu0 0
    %353 = vmatpush1.bf16.msra.mxu0 0
    %354 = vmatprep.subr.bf16.mxu0 0
    %355 = vmatpush1.bf16.msra.mxu0 0
    %356 = vmatprep.subr.bf16.mxu0 0
    %357 = vmatpush1.bf16.msra.mxu0 0
    %358 = vmatprep.subr.bf16.mxu0 0
    %359 = vmatpush1.bf16.msra.mxu0 0
    %360 = vmatprep.subr.bf16.mxu0 0
    %361 = vmatpush1.bf16.msra.mxu0 0
    %362 = vmatprep.subr.bf16.mxu0 0
    %363 = vmatpush1.bf16.msra.mxu0 0
    %364 = vmatprep.subr.bf16.mxu0 0
    %365 = vmatpush1.bf16.msra.mxu0 0
    %366 = vmatprep.subr.bf16.mxu0 0
    %367 = vmatpush1.bf16.msra.mxu0 0
    %368 = vmatprep.subr.bf16.mxu0 0
    %369 = vmatpush1.bf16.msra.mxu0 0
    %370 = vmatprep.subr.bf16.mxu0 0
    %371 = vmatpush1.bf16.msra.mxu0 0
    %372 = vmatprep.subr.bf16.mxu0 0
    %373 = vmatpush1.bf16.msra.mxu0 0
    %374 = vmatprep.mubr.bf16.mxu0 0
    %375 = vmatmul.mubr.bf16.gmra.mrb[0].mxu0 %v217
    %v376 = vpop.f32.mrb[0].mxu0
    %v377 = vadd.f32 %v122, %v376
    %v378 = vpop.f32.mrb[0].mxu0
    %v379 = vadd.f32 %v126, %v378
    %v380 = vpop.f32.mrb[0].mxu0
    %v381 = vpop.f32.mrb[0].mxu0
    %382 = vdwg.mxu0
    %v383 = vmax.f32 %v254, 0.0
    %v384 = vmax.f32 %v256, 0.0
    %v385 = vmax.f32 %v295, 0.0
    %v386 = vmax.f32 %v297, 0.0
    %v387 = vmax.f32 %v336, 0.0
    %v388 = vmax.f32 %v338, 0.0
    %v389 = vmax.f32 %v377, 0.0
    %v390 = vmax.f32 %v379, 0.0
    %v391 = vpack.c.bf16 %v383, %v383
    %v392 = vpack.c.bf16 %v384, %v384
    %v393 = vpack.c.bf16 %v385, %v385
    %v394 = vpack.c.bf16 %v386, %v386
    %v395 = vpack.c.bf16 %v387, %v387
    %v396 = vpack.c.bf16 %v388, %v388
    %v397 = vpack.c.bf16 %v389, %v389
    %v398 = vpack.c.bf16 %v390, %v390
    %v407 = vunpack.c.l.b16 %v391
    %v408 = vunpack.c.l.b16 %v392
    %v409 = vunpack.c.l.b16 %v393
    %v410 = vunpack.c.l.b16 %v394
    %v411 = vunpack.c.l.b16 %v395
    %v412 = vunpack.c.l.b16 %v396
    %v413 = vunpack.c.l.b16 %v397
    %v414 = vunpack.c.l.b16 %v398
    %v415 = vpack.c.b16 %v408, %v407
    %v416 = vpack.c.b16 %v410, %v409
    %v417 = vpack.c.b16 %v412, %v411
    %v418 = vpack.c.b16 %v414, %v413
    %423 = vst [vmem:[#allocation10] sm:$0xff] %v415
    %424 = vst [vmem:[#allocation10 + $0x8] sm:$0xff] %v416
    %425 = vst [vmem:[#allocation10 + $0x10] sm:$0xff] %v417
    %426 = vst [vmem:[#allocation10 + $0x18] sm:$0xff] %v418
    %v427 = vld [vmem:[#allocation8] sm:$0xf]
    %v428 = vld [vmem:[#allocation8 + $0x4] sm:$0xf]
    %v429 = vld [vmem:[#allocation8 + $0x8] sm:$0xf]
    %v430 = vld [vmem:[#allocation8 + $0xc] sm:$0xf]
    %v431 = vld [vmem:[#allocation8 + $0x10] sm:$0xf]
    %v432 = vld [vmem:[#allocation8 + $0x14] sm:$0xf]
    %v433 = vld [vmem:[#allocation8 + $0x18] sm:$0xf]
    %v434 = vld [vmem:[#allocation8 + $0x1c] sm:$0xf]
    %v435 = vld [vmem:[#allocation8 + $0x20] sm:$0xf]
    %v436 = vld [vmem:[#allocation8 + $0x24] sm:$0xf]
    %v437 = vld [vmem:[#allocation8 + $0x28] sm:$0xf]
    %v438 = vld [vmem:[#allocation8 + $0x2c] sm:$0xf]
    %v439 = vld [vmem:[#allocation8 + $0x30] sm:$0xf]
    %v440 = vld [vmem:[#allocation8 + $0x34] sm:$0xf]
    %v441 = vld [vmem:[#allocation8 + $0x38] sm:$0xf]
    %v442 = vld [vmem:[#allocation8 + $0x3c] sm:$0xf]
    %v443 = vld [vmem:[#allocation8 + $0x40] sm:$0xf]
    %v444 = vld [vmem:[#allocation8 + $0x44] sm:$0xf]
    %v445 = vld [vmem:[#allocation8 + $0x48] sm:$0xf]
    %v446 = vld [vmem:[#allocation8 + $0x4c] sm:$0xf]
    %v447 = vld [vmem:[#allocation8 + $0x50] sm:$0xf]
    %v448 = vld [vmem:[#allocation8 + $0x54] sm:$0xf]
    %v449 = vld [vmem:[#allocation8 + $0x58] sm:$0xf]
    %v450 = vld [vmem:[#allocation8 + $0x5c] sm:$0xf]
    %v451 = vld [vmem:[#allocation8 + $0x60] sm:$0xf]
    %v452 = vld [vmem:[#allocation8 + $0x64] sm:$0xf]
    %v453 = vld [vmem:[#allocation8 + $0x68] sm:$0xf]
    %v454 = vld [vmem:[#allocation8 + $0x6c] sm:$0xf]
    %v455 = vld [vmem:[#allocation8 + $0x70] sm:$0xf]
    %v456 = vld [vmem:[#allocation8 + $0x74] sm:$0xf]
    %v457 = vld [vmem:[#allocation8 + $0x78] sm:$0xf]
    %v458 = vld [vmem:[#allocation8 + $0x7c] sm:$0xf]
    %v459 = vld [vmem:[#allocation8 + $0x80] sm:$0xf]
    %v460 = vld [vmem:[#allocation8 + $0x84] sm:$0xf]
    %v461 = vld [vmem:[#allocation8 + $0x88] sm:$0xf]
    %v462 = vld [vmem:[#allocation8 + $0x8c] sm:$0xf]
    %v463 = vld [vmem:[#allocation8 + $0x90] sm:$0xf]
    %v464 = vld [vmem:[#allocation8 + $0x94] sm:$0xf]
    %v465 = vld [vmem:[#allocation8 + $0x98] sm:$0xf]
    %v466 = vld [vmem:[#allocation8 + $0x9c] sm:$0xf]
    %v467 = vld [vmem:[#allocation8 + $0xa0] sm:$0xf]
    %v468 = vld [vmem:[#allocation8 + $0xa4] sm:$0xf]
    %v469 = vld [vmem:[#allocation8 + $0xa8] sm:$0xf]
    %v470 = vld [vmem:[#allocation8 + $0xac] sm:$0xf]
    %v471 = vld [vmem:[#allocation8 + $0xb0] sm:$0xf]
    %v472 = vld [vmem:[#allocation8 + $0xb4] sm:$0xf]
    %v473 = vld [vmem:[#allocation8 + $0xb8] sm:$0xf]
    %v474 = vld [vmem:[#allocation8 + $0xbc] sm:$0xf]
    %v475 = vld [vmem:[#allocation8 + $0xc0] sm:$0xf]
    %v476 = vld [vmem:[#allocation8 + $0xc4] sm:$0xf]
    %v477 = vld [vmem:[#allocation8 + $0xc8] sm:$0xf]
    %v478 = vld [vmem:[#allocation8 + $0xcc] sm:$0xf]
    %v479 = vld [vmem:[#allocation8 + $0xd0] sm:$0xf]
    %v480 = vld [vmem:[#allocation8 + $0xd4] sm:$0xf]
    %v481 = vld [vmem:[#allocation8 + $0xd8] sm:$0xf]
    %v482 = vld [vmem:[#allocation8 + $0xdc] sm:$0xf]
    %v483 = vld [vmem:[#allocation8 + $0xe0] sm:$0xf]
    %v484 = vld [vmem:[#allocation8 + $0xe4] sm:$0xf]
    %v485 = vld [vmem:[#allocation8 + $0xe8] sm:$0xf]
    %v486 = vld [vmem:[#allocation8 + $0xec] sm:$0xf]
    %v487 = vld [vmem:[#allocation8 + $0xf0] sm:$0xf]
    %v488 = vld [vmem:[#allocation8 + $0xf4] sm:$0xf]
    %v489 = vld [vmem:[#allocation8 + $0xf8] sm:$0xf]
    %v490 = vld [vmem:[#allocation8 + $0xfc] sm:$0xf]
    %v491 = vld [vmem:[#allocation8 + $0x100] sm:$0xf]
    %v492 = vld [vmem:[#allocation8 + $0x104] sm:$0xf]
    %v493 = vld [vmem:[#allocation8 + $0x108] sm:$0xf]
    %v494 = vld [vmem:[#allocation8 + $0x10c] sm:$0xf]
    %v495 = vld [vmem:[#allocation8 + $0x110] sm:$0xf]
    %v496 = vld [vmem:[#allocation8 + $0x114] sm:$0xf]
    %v497 = vld [vmem:[#allocation8 + $0x118] sm:$0xf]
    %v498 = vld [vmem:[#allocation8 + $0x11c] sm:$0xf]
    %v499 = vld [vmem:[#allocation8 + $0x120] sm:$0xf]
    %v500 = vld [vmem:[#allocation8 + $0x124] sm:$0xf]
    %v501 = vld [vmem:[#allocation8 + $0x128] sm:$0xf]
    %v502 = vld [vmem:[#allocation8 + $0x12c] sm:$0xf]
    %v503 = vld [vmem:[#allocation8 + $0x130] sm:$0xf]
    %v504 = vld [vmem:[#allocation8 + $0x134] sm:$0xf]
    %v505 = vld [vmem:[#allocation8 + $0x138] sm:$0xf]
    %v506 = vld [vmem:[#allocation8 + $0x13c] sm:$0xf]
    %v507 = vld [vmem:[#allocation8 + $0x140] sm:$0xf]
    %v508 = vld [vmem:[#allocation8 + $0x144] sm:$0xf]
    %v509 = vld [vmem:[#allocation8 + $0x148] sm:$0xf]
    %v510 = vld [vmem:[#allocation8 + $0x14c] sm:$0xf]
    %v511 = vld [vmem:[#allocation8 + $0x150] sm:$0xf]
    %v512 = vld [vmem:[#allocation8 + $0x154] sm:$0xf]
    %v513 = vld [vmem:[#allocation8 + $0x158] sm:$0xf]
    %v514 = vld [vmem:[#allocation8 + $0x15c] sm:$0xf]
    %v515 = vld [vmem:[#allocation8 + $0x160] sm:$0xf]
    %v516 = vld [vmem:[#allocation8 + $0x164] sm:$0xf]
    %v517 = vld [vmem:[#allocation8 + $0x168] sm:$0xf]
    %v518 = vld [vmem:[#allocation8 + $0x16c] sm:$0xf]
    %v519 = vld [vmem:[#allocation8 + $0x170] sm:$0xf]
    %v520 = vld [vmem:[#allocation8 + $0x174] sm:$0xf]
    %v521 = vld [vmem:[#allocation8 + $0x178] sm:$0xf]
    %v522 = vld [vmem:[#allocation8 + $0x17c] sm:$0xf]
    %v523 = vld [vmem:[#allocation8 + $0x180] sm:$0xf]
    %v524 = vld [vmem:[#allocation8 + $0x184] sm:$0xf]
    %v525 = vld [vmem:[#allocation8 + $0x188] sm:$0xf]
    %v526 = vld [vmem:[#allocation8 + $0x18c] sm:$0xf]
    %v527 = vld [vmem:[#allocation8 + $0x190] sm:$0xf]
    %v528 = vld [vmem:[#allocation8 + $0x194] sm:$0xf]
    %v529 = vld [vmem:[#allocation8 + $0x198] sm:$0xf]
    %v530 = vld [vmem:[#allocation8 + $0x19c] sm:$0xf]
    %v531 = vld [vmem:[#allocation8 + $0x1a0] sm:$0xf]
    %v532 = vld [vmem:[#allocation8 + $0x1a4] sm:$0xf]
    %v533 = vld [vmem:[#allocation8 + $0x1a8] sm:$0xf]
    %v534 = vld [vmem:[#allocation8 + $0x1ac] sm:$0xf]
    %v535 = vld [vmem:[#allocation8 + $0x1b0] sm:$0xf]
    %v536 = vld [vmem:[#allocation8 + $0x1b4] sm:$0xf]
    %v537 = vld [vmem:[#allocation8 + $0x1b8] sm:$0xf]
    %v538 = vld [vmem:[#allocation8 + $0x1bc] sm:$0xf]
    %v539 = vld [vmem:[#allocation8 + $0x1c0] sm:$0xf]
    %v540 = vld [vmem:[#allocation8 + $0x1c4] sm:$0xf]
    %v541 = vld [vmem:[#allocation8 + $0x1c8] sm:$0xf]
    %v542 = vld [vmem:[#allocation8 + $0x1cc] sm:$0xf]
    %v543 = vld [vmem:[#allocation8 + $0x1d0] sm:$0xf]
    %v544 = vld [vmem:[#allocation8 + $0x1d4] sm:$0xf]
    %v545 = vld [vmem:[#allocation8 + $0x1d8] sm:$0xf]
    %v546 = vld [vmem:[#allocation8 + $0x1dc] sm:$0xf]
    %v547 = vld [vmem:[#allocation8 + $0x1e0] sm:$0xf]
    %v548 = vld [vmem:[#allocation8 + $0x1e4] sm:$0xf]
    %v549 = vld [vmem:[#allocation8 + $0x1e8] sm:$0xf]
    %v550 = vld [vmem:[#allocation8 + $0x1ec] sm:$0xf]
    %v551 = vld [vmem:[#allocation8 + $0x1f0] sm:$0xf]
    %v552 = vld [vmem:[#allocation8 + $0x1f4] sm:$0xf]
    %v553 = vld [vmem:[#allocation8 + $0x1f8] sm:$0xf]
    %v554 = vld [vmem:[#allocation8 + $0x1fc] sm:$0xf]
    %v555 = vld [vmem:[%s4] sm:$0x1]
    %v557 = vlaneseq
    %v558 = vshrl.u32 %v557, 7
    %v559 = vsub.s32 0, %v558
    %v560 = vrot.slane %v555, %v559
    %v690 = vunpack.c.l.b16 %v427
    %v691 = vunpack.c.l.b16 %v428
    %v692 = vunpack.c.l.b16 %v429
    %v693 = vunpack.c.l.b16 %v430
    %v694 = vunpack.c.l.b16 %v431
    %v695 = vunpack.c.l.b16 %v432
    %v696 = vunpack.c.l.b16 %v433
    %v697 = vunpack.c.l.b16 %v434
    %v698 = vunpack.c.l.b16 %v435
    %v699 = vunpack.c.l.b16 %v436
    %v700 = vunpack.c.l.b16 %v437
    %v701 = vunpack.c.l.b16 %v438
    %v702 = vunpack.c.l.b16 %v439
    %v703 = vunpack.c.l.b16 %v440
    %v704 = vunpack.c.l.b16 %v441
    %v705 = vunpack.c.l.b16 %v442
    %v706 = vunpack.c.l.b16 %v443
    %v707 = vunpack.c.l.b16 %v444
    %v708 = vunpack.c.l.b16 %v445
    %v709 = vunpack.c.l.b16 %v446
    %v710 = vunpack.c.l.b16 %v447
    %v711 = vunpack.c.l.b16 %v448
    %v712 = vunpack.c.l.b16 %v449
    %v713 = vunpack.c.l.b16 %v450
    %v714 = vunpack.c.l.b16 %v451
    %v715 = vunpack.c.l.b16 %v452
    %v716 = vunpack.c.l.b16 %v453
    %v717 = vunpack.c.l.b16 %v454
    %v718 = vunpack.c.l.b16 %v455
    %v719 = vunpack.c.l.b16 %v456
    %v720 = vunpack.c.l.b16 %v457
    %v721 = vunpack.c.l.b16 %v458
    %v722 = vunpack.c.l.b16 %v459
    %v723 = vunpack.c.l.b16 %v460
    %v724 = vunpack.c.l.b16 %v461
    %v725 = vunpack.c.l.b16 %v462
    %v726 = vunpack.c.l.b16 %v463
    %v727 = vunpack.c.l.b16 %v464
    %v728 = vunpack.c.l.b16 %v465
    %v729 = vunpack.c.l.b16 %v466
    %v730 = vunpack.c.l.b16 %v467
    %v731 = vunpack.c.l.b16 %v468
    %v732 = vunpack.c.l.b16 %v469
    %v733 = vunpack.c.l.b16 %v470
    %v734 = vunpack.c.l.b16 %v471
    %v735 = vunpack.c.l.b16 %v472
    %v736 = vunpack.c.l.b16 %v473
    %v737 = vunpack.c.l.b16 %v474
    %v738 = vunpack.c.l.b16 %v475
    %v739 = vunpack.c.l.b16 %v476
    %v740 = vunpack.c.l.b16 %v477
    %v741 = vunpack.c.l.b16 %v478
    %v742 = vunpack.c.l.b16 %v479
    %v743 = vunpack.c.l.b16 %v480
    %v744 = vunpack.c.l.b16 %v481
    %v745 = vunpack.c.l.b16 %v482
    %v746 = vunpack.c.l.b16 %v483
    %v747 = vunpack.c.l.b16 %v484
    %v748 = vunpack.c.l.b16 %v485
    %v749 = vunpack.c.l.b16 %v486
    %v750 = vunpack.c.l.b16 %v487
    %v751 = vunpack.c.l.b16 %v488
    %v752 = vunpack.c.l.b16 %v489
    %v753 = vunpack.c.l.b16 %v490
    %v754 = vunpack.c.l.b16 %v491
    %v755 = vunpack.c.l.b16 %v492
    %v756 = vunpack.c.l.b16 %v493
    %v757 = vunpack.c.l.b16 %v494
    %v758 = vunpack.c.l.b16 %v495
    %v759 = vunpack.c.l.b16 %v496
    %v760 = vunpack.c.l.b16 %v497
    %v761 = vunpack.c.l.b16 %v498
    %v762 = vunpack.c.l.b16 %v499
    %v763 = vunpack.c.l.b16 %v500
    %v764 = vunpack.c.l.b16 %v501
    %v765 = vunpack.c.l.b16 %v502
    %v766 = vunpack.c.l.b16 %v503
    %v767 = vunpack.c.l.b16 %v504
    %v768 = vunpack.c.l.b16 %v505
    %v769 = vunpack.c.l.b16 %v506
    %v770 = vunpack.c.l.b16 %v507
    %v771 = vunpack.c.l.b16 %v508
    %v772 = vunpack.c.l.b16 %v509
    %v773 = vunpack.c.l.b16 %v510
    %v774 = vunpack.c.l.b16 %v511
    %v775 = vunpack.c.l.b16 %v512
    %v776 = vunpack.c.l.b16 %v513
    %v777 = vunpack.c.l.b16 %v514
    %v778 = vunpack.c.l.b16 %v515
    %v779 = vunpack.c.l.b16 %v516
    %v780 = vunpack.c.l.b16 %v517
    %v781 = vunpack.c.l.b16 %v518
    %v782 = vunpack.c.l.b16 %v519
    %v783 = vunpack.c.l.b16 %v520
    %v784 = vunpack.c.l.b16 %v521
    %v785 = vunpack.c.l.b16 %v522
    %v786 = vunpack.c.l.b16 %v523
    %v787 = vunpack.c.l.b16 %v524
    %v788 = vunpack.c.l.b16 %v525
    %v789 = vunpack.c.l.b16 %v526
    %v790 = vunpack.c.l.b16 %v527
    %v791 = vunpack.c.l.b16 %v528
    %v792 = vunpack.c.l.b16 %v529
    %v793 = vunpack.c.l.b16 %v530
    %v794 = vunpack.c.l.b16 %v531
    %v795 = vunpack.c.l.b16 %v532
    %v796 = vunpack.c.l.b16 %v533
    %v797 = vunpack.c.l.b16 %v534
    %v798 = vunpack.c.l.b16 %v535
    %v799 = vunpack.c.l.b16 %v536
    %v800 = vunpack.c.l.b16 %v537
    %v801 = vunpack.c.l.b16 %v538
    %v802 = vunpack.c.l.b16 %v539
    %v803 = vunpack.c.l.b16 %v540
    %v804 = vunpack.c.l.b16 %v541
    %v805 = vunpack.c.l.b16 %v542
    %v806 = vunpack.c.l.b16 %v543
    %v807 = vunpack.c.l.b16 %v544
    %v808 = vunpack.c.l.b16 %v545
    %v809 = vunpack.c.l.b16 %v546
    %v810 = vunpack.c.l.b16 %v547
    %v811 = vunpack.c.l.b16 %v548
    %v812 = vunpack.c.l.b16 %v549
    %v813 = vunpack.c.l.b16 %v550
    %v814 = vunpack.c.l.b16 %v551
    %v815 = vunpack.c.l.b16 %v552
    %v816 = vunpack.c.l.b16 %v553
    %v817 = vunpack.c.l.b16 %v554
    %v818 = vpack.c.b16 %v691, %v690
    %v819 = vpack.c.b16 %v693, %v692
    %v820 = vpack.c.b16 %v695, %v694
    %v821 = vpack.c.b16 %v697, %v696
    %v822 = vpack.c.b16 %v699, %v698
    %v823 = vpack.c.b16 %v701, %v700
    %v824 = vpack.c.b16 %v703, %v702
    %v825 = vpack.c.b16 %v705, %v704
    %v826 = vpack.c.b16 %v707, %v706
    %v827 = vpack.c.b16 %v709, %v708
    %v828 = vpack.c.b16 %v711, %v710
    %v829 = vpack.c.b16 %v713, %v712
    %v830 = vpack.c.b16 %v715, %v714
    %v831 = vpack.c.b16 %v717, %v716
    %v832 = vpack.c.b16 %v719, %v718
    %v833 = vpack.c.b16 %v721, %v720
    %v834 = vpack.c.b16 %v723, %v722
    %v835 = vpack.c.b16 %v725, %v724
    %v836 = vpack.c.b16 %v727, %v726
    %v837 = vpack.c.b16 %v729, %v728
    %v838 = vpack.c.b16 %v731, %v730
    %v839 = vpack.c.b16 %v733, %v732
    %v840 = vpack.c.b16 %v735, %v734
    %v841 = vpack.c.b16 %v737, %v736
    %v842 = vpack.c.b16 %v739, %v738
    %v843 = vpack.c.b16 %v741, %v740
    %v844 = vpack.c.b16 %v743, %v742
    %v845 = vpack.c.b16 %v745, %v744
    %v846 = vpack.c.b16 %v747, %v746
    %v847 = vpack.c.b16 %v749, %v748
    %v848 = vpack.c.b16 %v751, %v750
    %v849 = vpack.c.b16 %v753, %v752
    %v850 = vpack.c.b16 %v755, %v754
    %v851 = vpack.c.b16 %v757, %v756
    %v852 = vpack.c.b16 %v759, %v758
    %v853 = vpack.c.b16 %v761, %v760
    %v854 = vpack.c.b16 %v763, %v762
    %v855 = vpack.c.b16 %v765, %v764
    %v856 = vpack.c.b16 %v767, %v766
    %v857 = vpack.c.b16 %v769, %v768
    %v858 = vpack.c.b16 %v771, %v770
    %v859 = vpack.c.b16 %v773, %v772
    %v860 = vpack.c.b16 %v775, %v774
    %v861 = vpack.c.b16 %v777, %v776
    %v862 = vpack.c.b16 %v779, %v778
    %v863 = vpack.c.b16 %v781, %v780
    %v864 = vpack.c.b16 %v783, %v782
    %v865 = vpack.c.b16 %v785, %v784
    %v866 = vpack.c.b16 %v787, %v786
    %v867 = vpack.c.b16 %v789, %v788
    %v868 = vpack.c.b16 %v791, %v790
    %v869 = vpack.c.b16 %v793, %v792
    %v870 = vpack.c.b16 %v795, %v794
    %v871 = vpack.c.b16 %v797, %v796
    %v872 = vpack.c.b16 %v799, %v798
    %v873 = vpack.c.b16 %v801, %v800
    %v874 = vpack.c.b16 %v803, %v802
    %v875 = vpack.c.b16 %v805, %v804
    %v876 = vpack.c.b16 %v807, %v806
    %v877 = vpack.c.b16 %v809, %v808
    %v878 = vpack.c.b16 %v811, %v810
    %v879 = vpack.c.b16 %v813, %v812
    %v880 = vpack.c.b16 %v815, %v814
    %v881 = vpack.c.b16 %v817, %v816
    %946 = vmatprep.subr.bf16.mxu0 0
    %947 = vmatpush1.bf16.msra.mxu0 %v818
    %948 = vmatprep.subr.bf16.mxu0 0
    %949 = vmatpush1.bf16.msra.mxu0 %v819
    %950 = vmatprep.subr.bf16.mxu0 0
    %951 = vmatpush1.bf16.msra.mxu0 %v820
    %952 = vmatprep.subr.bf16.mxu0 0
    %953 = vmatpush1.bf16.msra.mxu0 %v821
    %954 = vmatprep.subr.bf16.mxu0 0
    %955 = vmatpush1.bf16.msra.mxu0 %v822
    %956 = vmatprep.subr.bf16.mxu0 0
    %957 = vmatpush1.bf16.msra.mxu0 %v823
    %958 = vmatprep.subr.bf16.mxu0 0
    %959 = vmatpush1.bf16.msra.mxu0 %v824
    %960 = vmatprep.subr.bf16.mxu0 0
    %961 = vmatpush1.bf16.msra.mxu0 %v825
    %962 = vmatprep.subr.bf16.mxu0 0
    %963 = vmatpush1.bf16.msra.mxu0 %v826
    %964 = vmatprep.subr.bf16.mxu0 0
    %965 = vmatpush1.bf16.msra.mxu0 %v827
    %966 = vmatprep.subr.bf16.mxu0 0
    %967 = vmatpush1.bf16.msra.mxu0 %v828
    %968 = vmatprep.subr.bf16.mxu0 0
    %969 = vmatpush1.bf16.msra.mxu0 %v829
    %970 = vmatprep.subr.bf16.mxu0 0
    %971 = vmatpush1.bf16.msra.mxu0 %v830
    %972 = vmatprep.subr.bf16.mxu0 0
    %973 = vmatpush1.bf16.msra.mxu0 %v831
    %974 = vmatprep.subr.bf16.mxu0 0
    %975 = vmatpush1.bf16.msra.mxu0 %v832
    %976 = vmatprep.subr.bf16.mxu0 0
    %977 = vmatpush1.bf16.msra.mxu0 %v833
    %978 = vmatprep.mubr.bf16.mxu0 %v392
    %979 = vmatmul.mubr.bf16.gmra.mrb[0].mxu0 %v391
    %v980 = vpop.f32.mrb[0].mxu0
    %v981 = vadd.f32 %v560, %v980
    %v982 = vpop.f32.mrb[0].mxu0
    %v983 = vpop.f32.mrb[0].mxu0
    %v984 = vpop.f32.mrb[0].mxu0
    %985 = vdwg.mxu0
    %986 = vmatprep.subr.bf16.mxu0 0
    %987 = vmatpush1.bf16.msra.mxu0 %v834
    %988 = vmatprep.subr.bf16.mxu0 0
    %989 = vmatpush1.bf16.msra.mxu0 %v835
    %990 = vmatprep.subr.bf16.mxu0 0
    %991 = vmatpush1.bf16.msra.mxu0 %v836
    %992 = vmatprep.subr.bf16.mxu0 0
    %993 = vmatpush1.bf16.msra.mxu0 %v837
    %994 = vmatprep.subr.bf16.mxu0 0
    %995 = vmatpush1.bf16.msra.mxu0 %v838
    %996 = vmatprep.subr.bf16.mxu0 0
    %997 = vmatpush1.bf16.msra.mxu0 %v839
    %998 = vmatprep.subr.bf16.mxu0 0
    %999 = vmatpush1.bf16.msra.mxu0 %v840
    %1000 = vmatprep.subr.bf16.mxu0 0
    %1001 = vmatpush1.bf16.msra.mxu0 %v841
    %1002 = vmatprep.subr.bf16.mxu0 0
    %1003 = vmatpush1.bf16.msra.mxu0 %v842
    %1004 = vmatprep.subr.bf16.mxu0 0
    %1005 = vmatpush1.bf16.msra.mxu0 %v843
    %1006 = vmatprep.subr.bf16.mxu0 0
    %1007 = vmatpush1.bf16.msra.mxu0 %v844
    %1008 = vmatprep.subr.bf16.mxu0 0
    %1009 = vmatpush1.bf16.msra.mxu0 %v845
    %1010 = vmatprep.subr.bf16.mxu0 0
    %1011 = vmatpush1.bf16.msra.mxu0 %v846
    %1012 = vmatprep.subr.bf16.mxu0 0
    %1013 = vmatpush1.bf16.msra.mxu0 %v847
    %1014 = vmatprep.subr.bf16.mxu0 0
    %1015 = vmatpush1.bf16.msra.mxu0 %v848
    %1016 = vmatprep.subr.bf16.mxu0 0
    %1017 = vmatpush1.bf16.msra.mxu0 %v849
    %1018 = vmatprep.mubr.bf16.mxu0 %v394
    %1019 = vmatmul.mubr.bf16.gmra.mrb[0].mxu0 %v393
    %v1020 = vpop.f32.mrb[0].mxu0
    %v1021 = vadd.f32 %v981, %v1020
    %v1022 = vpop.f32.mrb[0].mxu0
    %v1023 = vpop.f32.mrb[0].mxu0
    %v1024 = vpop.f32.mrb[0].mxu0
    %1025 = vdwg.mxu0
    %1026 = vmatprep.subr.bf16.mxu0 0
    %1027 = vmatpush1.bf16.msra.mxu0 %v850
    %1028 = vmatprep.subr.bf16.mxu0 0
    %1029 = vmatpush1.bf16.msra.mxu0 %v851
    %1030 = vmatprep.subr.bf16.mxu0 0
    %1031 = vmatpush1.bf16.msra.mxu0 %v852
    %1032 = vmatprep.subr.bf16.mxu0 0
    %1033 = vmatpush1.bf16.msra.mxu0 %v853
    %1034 = vmatprep.subr.bf16.mxu0 0
    %1035 = vmatpush1.bf16.msra.mxu0 %v854
    %1036 = vmatprep.subr.bf16.mxu0 0
    %1037 = vmatpush1.bf16.msra.mxu0 %v855
    %1038 = vmatprep.subr.bf16.mxu0 0
    %1039 = vmatpush1.bf16.msra.mxu0 %v856
    %1040 = vmatprep.subr.bf16.mxu0 0
    %1041 = vmatpush1.bf16.msra.mxu0 %v857
    %1042 = vmatprep.subr.bf16.mxu0 0
    %1043 = vmatpush1.bf16.msra.mxu0 %v858
    %1044 = vmatprep.subr.bf16.mxu0 0
    %1045 = vmatpush1.bf16.msra.mxu0 %v859
    %1046 = vmatprep.subr.bf16.mxu0 0
    %1047 = vmatpush1.bf16.msra.mxu0 %v860
    %1048 = vmatprep.subr.bf16.mxu0 0
    %1049 = vmatpush1.bf16.msra.mxu0 %v861
    %1050 = vmatprep.subr.bf16.mxu0 0
    %1051 = vmatpush1.bf16.msra.mxu0 %v862
    %1052 = vmatprep.subr.bf16.mxu0 0
    %1053 = vmatpush1.bf16.msra.mxu0 %v863
    %1054 = vmatprep.subr.bf16.mxu0 0
    %1055 = vmatpush1.bf16.msra.mxu0 %v864
    %1056 = vmatprep.subr.bf16.mxu0 0
    %1057 = vmatpush1.bf16.msra.mxu0 %v865
    %1058 = vmatprep.mubr.bf16.mxu0 %v396
    %1059 = vmatmul.mubr.bf16.gmra.mrb[0].mxu0 %v395
    %v1060 = vpop.f32.mrb[0].mxu0
    %v1061 = vadd.f32 %v1021, %v1060
    %v1062 = vpop.f32.mrb[0].mxu0
    %v1063 = vpop.f32.mrb[0].mxu0
    %v1064 = vpop.f32.mrb[0].mxu0
    %1065 = vdwg.mxu0
    %1066 = vmatprep.subr.bf16.mxu0 0
    %1067 = vmatpush1.bf16.msra.mxu0 %v866
    %1068 = vmatprep.subr.bf16.mxu0 0
    %1069 = vmatpush1.bf16.msra.mxu0 %v867
    %1070 = vmatprep.subr.bf16.mxu0 0
    %1071 = vmatpush1.bf16.msra.mxu0 %v868
    %1072 = vmatprep.subr.bf16.mxu0 0
    %1073 = vmatpush1.bf16.msra.mxu0 %v869
    %1074 = vmatprep.subr.bf16.mxu0 0
    %1075 = vmatpush1.bf16.msra.mxu0 %v870
    %1076 = vmatprep.subr.bf16.mxu0 0
    %1077 = vmatpush1.bf16.msra.mxu0 %v871
    %1078 = vmatprep.subr.bf16.mxu0 0
    %1079 = vmatpush1.bf16.msra.mxu0 %v872
    %1080 = vmatprep.subr.bf16.mxu0 0
    %1081 = vmatpush1.bf16.msra.mxu0 %v873
    %1082 = vmatprep.subr.bf16.mxu0 0
    %1083 = vmatpush1.bf16.msra.mxu0 %v874
    %1084 = vmatprep.subr.bf16.mxu0 0
    %1085 = vmatpush1.bf16.msra.mxu0 %v875
    %1086 = vmatprep.subr.bf16.mxu0 0
    %1087 = vmatpush1.bf16.msra.mxu0 %v876
    %1088 = vmatprep.subr.bf16.mxu0 0
    %1089 = vmatpush1.bf16.msra.mxu0 %v877
    %1090 = vmatprep.subr.bf16.mxu0 0
    %1091 = vmatpush1.bf16.msra.mxu0 %v878
    %1092 = vmatprep.subr.bf16.mxu0 0
    %1093 = vmatpush1.bf16.msra.mxu0 %v879
    %1094 = vmatprep.subr.bf16.mxu0 0
    %1095 = vmatpush1.bf16.msra.mxu0 %v880
    %1096 = vmatprep.subr.bf16.mxu0 0
    %1097 = vmatpush1.bf16.msra.mxu0 %v881
    %1098 = vmatprep.mubr.bf16.mxu0 %v398
    %1099 = vmatmul.mubr.bf16.gmra.mrb[0].mxu0 %v397
    %v1100 = vpop.f32.mrb[0].mxu0
    %v1101 = vadd.f32 %v1061, %v1100
    %v1102 = vpop.f32.mrb[0].mxu0
    %v1103 = vpop.f32.mrb[0].mxu0
    %v1104 = vpop.f32.mrb[0].mxu0
    %1105 = vdwg.mxu0
    %v1106 = vpack.c.bf16 %v1101, %v1101
    %1107 = vst [vmem:[%s6] sm:$0xf] %v1106
    // Predicated region
    $region38: #{emotion_forward.1} parent=1 // pred_check
      _
    $region39: #{emotion_forward.1} parent=1 // pred_check_branch
      %1109 = sbr.rel (0) target = $region41
    $region40: #{emotion_forward.1} parent=1 // pred_region
      %s1111 = ssub.s32 512, 512
      %1112 = vsyncadd [#allocation4], %s1111
      %s1114 = sshll.u32 [#allocation10], 4
      %s1115 = int_to_ptr.vmem [resolvable:$true] %s1114
      %1117 = dma.vmem_to_hbm [thread:$0]  %s1115, 512, %s5, [#allocation4]
    $region41: #{emotion_forward.1} parent=1 // pred_fallthru
      _
    // Predicated region
    $region42: #{emotion_forward.1} parent=1 // pred_check
      _
    $region43: #{emotion_forward.1} parent=1 // pred_check_branch
      %1119 = sbr.rel (0) target = $region45
    $region44: #{emotion_forward.1} parent=1 // pred_region
      _
    $region45: #{emotion_forward.1} parent=1 // pred_fallthru
      _
    // Predicated region
    $region46: #{emotion_forward.1} parent=1 // pred_check
      _
    $region47: #{emotion_forward.1} parent=1 // pred_check_branch
      %1121 = sbr.rel (0) target = $region49
    $region48: #{emotion_forward.1} parent=1 // pred_region
      %1122 = dma.done [#allocation4], 512
    $region49: #{emotion_forward.1} parent=1 // pred_fallthru
      _
    // Predicated region
    $region50: #{emotion_forward.1} parent=1 // pred_check
      _
    $region51: #{emotion_forward.1} parent=1 // pred_check_branch
      %1124 = sbr.rel (0) target = $region53
    $region52: #{emotion_forward.1} parent=1 // pred_region
      _
    $region53: #{emotion_forward.1} parent=1 // pred_fallthru
      _
    %1125 = vsyncpa [#allocation3], 1
    %1126 = vsyncpa [#allocation6], 1
    %1127 = vsyncpa [#allocation9], 1
    %1128 = vsyncpa [#allocation4], 1

</llo_original>
